<compile_context>
chip_gen: v5e
topology: v5e:2x2
jax: 0.10.0
libtpu: 0.0.40
codegen_flags: <defaults>
</compile_context>

<pallas_src>
import functools

import jax
import jax.numpy as jnp
from jax.experimental import pallas as pl
from jax.experimental.pallas import tpu as pltpu


# ---------------------------------------------------------------------------
# Packed-parameter slab layout (host side, computed once per parameter set)
# ---------------------------------------------------------------------------

def _slab_offsets(nbr_nodes, n, hid):
    """Row offsets of each parameter section in the packed [total, hid] slab."""
    o, cur = {}, 0

    def sec(name, rows):
        nonlocal cur
        o[name] = cur
        cur += rows

    sec("w_lin", nbr_nodes)   # Linear weight  [nbr_nodes, in_ch] lane-padded to hid
    sec("b_lin", n)           # Linear bias broadcast to n rows (lane-padded)
    sec("w1", 2 * hid)        # [w_rel1 ; 0 ; w_root1 ; 0]  (fan_in padded to hid)
    sec("b1", n)
    sec("w2", 2 * hid)        # [w_rel2 ; w_root2]
    sec("b2", n)
    sec("w3", 2 * hid)        # [w_rel3 ; w_root3]  lane-padded to hid
    sec("b3", n)
    o["total"] = cur
    return o


def pack_params(params, *, nbr_nodes, n, in_ch, hid_ch, out_ch):
    """Build the single [total, hid_ch] f32 parameter slab."""
    L = hid_ch
    assert in_ch <= L and out_ch <= L, "padding scheme assumes hid >= in/out"

    def pad_lanes(a):
        return jnp.pad(a, ((0, 0), (0, L - a.shape[-1])))

    def bias_rows(b):                              # [1, C] -> [n, L]
        return jnp.broadcast_to(pad_lanes(b), (n, L))

    def cat_rows(w_rel, w_root):
        # Fused fan_in layout matching concat([agg, h], -1) with h padded to L lanes.
        w = jnp.zeros((2 * L, L), jnp.float32)
        c = w_rel.shape[0]
        w = w.at[:c, : w_rel.shape[1]].set(w_rel)
        w = w.at[L : L + c, : w_root.shape[1]].set(w_root)
        return w

    slab = jnp.concatenate(
        [
            pad_lanes(params["w_lin"]),
            bias_rows(params["b_lin"]),
            cat_rows(params["w_rel1"], params["w_root1"]),
            bias_rows(params["b_rel1"]),
            cat_rows(params["w_rel2"], params["w_root2"]),
            bias_rows(params["b_rel2"]),
            cat_rows(params["w_rel3"], params["w_root3"]),
            bias_rows(params["b_rel3"]),
        ],
        axis=0,
    ).astype(jnp.float32)

    assert slab.shape[0] == _slab_offsets(nbr_nodes, n, hid_ch)["total"]
    return slab


# ---------------------------------------------------------------------------
# Fused kernel
# ---------------------------------------------------------------------------

def _teacher_edge_kernel(adj_ref, pe_ref, x_nan_ref, wb_ref,
                         h_ref, xfill_ref,
                         *, nbr_nodes, n, in_ch, hid_ch, offs):
    f32 = jnp.float32

    # Row-normalized adjacency (mean aggregator): A_n = A * 1/clamp(deg, 1)
    adj = adj_ref[...]
    deg = jnp.maximum(jnp.sum(adj, axis=-1, keepdims=True), 1.0)
    adj_n = adj * pl.reciprocal(deg, approx=False)

    # x = Linear(pe_feat); lanes >= in_ch stay exactly 0 (zero-padded weight/bias)
    w_lin = wb_ref[pl.ds(offs["w_lin"], nbr_nodes), :]
    b_lin = wb_ref[pl.ds(offs["b_lin"], n), :]
    x = jnp.dot(pe_ref[...], w_lin, preferred_element_type=f32) + b_lin

    # In-place NaN fill of X (aliased input/output), fused into the kernel.
    X = x_nan_ref[...]
    xfill_ref[...] = jnp.where(jnp.isnan(X), x[:, :in_ch], X)

    # Fused DenseSAGEConv: [agg | h] @ [w_rel ; w_root] + b_rel
    def sage(h, w_name, b_name):
        w = wb_ref[pl.ds(offs[w_name], 2 * hid_ch), :]
        b = wb_ref[pl.ds(offs[b_name], n), :]
        agg = jnp.dot(adj_n, h, preferred_element_type=f32)
        cat = jnp.concatenate([agg, h], axis=-1)
        return jnp.dot(cat, w, preferred_element_type=f32) + b

    h1 = sage(x, "w1", "b1")
    h1a = jnp.where(h1 > 0, h1, 0.01 * h1)   # leaky_relu; dropout = identity (eval)
    h2 = sage(h1a, "w2", "b2")
    h2a = jnp.where(h2 > 0, h2, 0.01 * h2)
    h3 = sage(h2a, "w3", "b3")               # lanes >= out_ch are exactly 0

    # Single packed output store: [h1 | h2 | h3_padded]
    h_ref[...] = jnp.concatenate([h1, h2, h3], axis=-1)


# ---------------------------------------------------------------------------
# Wrapper
# ---------------------------------------------------------------------------

@functools.partial(jax.jit, static_argnums=(4,))
def teacher_edge_forward(Adj, pe_feat, X, slab, out_ch):
    """Returns (h3, [h1, h2, h3], X_filled)."""
    n = Adj.shape[0]
    nbr_nodes = pe_feat.shape[1]
    in_ch = X.shape[1]
    hid_ch = slab.shape[1]
    offs = _slab_offsets(nbr_nodes, n, hid_ch)
    assert slab.shape[0] == offs["total"]

    kernel = functools.partial(
        _teacher_edge_kernel,
        nbr_nodes=nbr_nodes, n=n, in_ch=in_ch, hid_ch=hid_ch, offs=offs)

    vmem = pl.BlockSpec(memory_space=pltpu.VMEM)
    packed, X_filled = pl.pallas_call(
        kernel,
        out_shape=(
            jax.ShapeDtypeStruct((n, 3 * hid_ch), jnp.float32),  # h1|h2|h3pad
            jax.ShapeDtypeStruct((n, in_ch), jnp.float32),       # X_filled
        ),
        in_specs=[vmem, vmem, vmem, vmem],
        out_specs=(vmem, vmem),
        input_output_aliases={2: 1},   # X (input 2) aliases X_filled (output 1)
    )(Adj, pe_feat, X, slab)

    h1 = packed[:, :hid_ch]
    h2 = packed[:, hid_ch:2 * hid_ch]
    h3 = packed[:, 2 * hid_ch:2 * hid_ch + out_ch]
    return h3, [h1, h2, h3], X_filled


# ---------------------------------------------------------------------------
# Parameters / reference
# ---------------------------------------------------------------------------

def init_params(key, nbr_nodes, in_ch, hid_ch, out_ch):
    """Deterministic synthetic parameters, stored pre-transposed [fan_in, fan_out]."""
    ks = jax.random.split(key, 8)

    def w(k, fan_in, fan_out):
        scale = 1.0 / jnp.sqrt(jnp.float32(fan_in))
        return (jax.random.uniform(k, (fan_in, fan_out), jnp.float32,
                                   minval=-1.0, maxval=1.0) * scale)

    return {
        "w_lin": w(ks[0], nbr_nodes, in_ch),
        "b_lin": jnp.zeros((1, in_ch), jnp.float32) + 0.01,
        "w_rel1": w(ks[1], in_ch, hid_ch),
        "b_rel1": jnp.zeros((1, hid_ch), jnp.float32) + 0.02,
        "w_root1": w(ks[2], in_ch, hid_ch),
        "w_rel2": w(ks[3], hid_ch, hid_ch),
        "b_rel2": jnp.zeros((1, hid_ch), jnp.float32) + 0.03,
        "w_root2": w(ks[4], hid_ch, hid_ch),
        "w_rel3": w(ks[5], hid_ch, out_ch),
        "b_rel3": jnp.zeros((1, out_ch), jnp.float32) + 0.04,
        "w_root3": w(ks[6], hid_ch, out_ch),
    }


def reference_forward(Adj, pe_feat, X, params):
    """Pure-JAX reference of the PyTorch forward (eval mode)."""
    x = pe_feat @ params["w_lin"] + params["b_lin"]
    X_filled = jnp.where(jnp.isnan(X), x, X)
    deg = jnp.maximum(jnp.sum(Adj, axis=-1, keepdims=True), 1.0)

    def sage(h, wr, br, wt):
        agg = (Adj @ h) / deg
        return agg @ wr + br + h @ wt

    h1 = sage(x, params["w_rel1"], params["b_rel1"], params["w_root1"])
    h1a = jnp.where(h1 > 0, h1, 0.01 * h1)
    h2 = sage(h1a, params["w_rel2"], params["b_rel2"], params["w_root2"])
    h2a = jnp.where(h2 > 0, h2, 0.01 * h2)
    h3 = sage(h2a, params["w_rel3"], params["b_rel3"], params["w_root3"])
    return h3, [h1, h2, h3], X_filled


# ---------------------------------------------------------------------------
# Test
# ---------------------------------------------------------------------------

if __name__ == "__main__":
    # Shapes consistent with the module:
    #   nbr_nodes=8, in_channels=16, hid_channels=32, out_channels=8
    nbr_nodes, in_ch, hid_ch, out_ch = 8, 16, 32, 8

    key = jax.random.PRNGKey(0)
    k_adj, k_pe, k_x, k_par = jax.random.split(key, 4)

    # Symmetric 0/1 adjacency with self loops.
    a = (jax.random.uniform(k_adj, (nbr_nodes, nbr_nodes)) > 0.5).astype(jnp.float32)
    Adj = jnp.clip(a + a.T + jnp.eye(nbr_nodes, dtype=jnp.float32), 0.0, 1.0)

    pe_feat = jax.random.normal(k_pe, (nbr_nodes, nbr_nodes), jnp.float32)

    # X with some NaNs (used only for the in-place fill side effect).
    X = jax.random.normal(k_x, (nbr_nodes, in_ch), jnp.float32)
    X = X.at[0, 0].set(jnp.nan).at[3, 5].set(jnp.nan)

    params = init_params(k_par, nbr_nodes, in_ch, hid_ch, out_ch)
    slab = pack_params(params, nbr_nodes=nbr_nodes, n=nbr_nodes,
                       in_ch=in_ch, hid_ch=hid_ch, out_ch=out_ch)

    h3, mids, X_filled = teacher_edge_forward(Adj, pe_feat, X, slab, out_ch)
    jax.block_until_ready((h3, mids, X_filled))

    # Validate against the pure-JAX reference.
    h3_ref, mids_ref, Xf_ref = reference_forward(Adj, pe_feat, X, params)
    assert h3.shape == (nbr_nodes, out_ch)
    assert mids[0].shape == (nbr_nodes, hid_ch)
    assert mids[1].shape == (nbr_nodes, hid_ch)
    assert mids[2].shape == (nbr_nodes, out_ch)
    assert jnp.allclose(h3, h3_ref, atol=1e-5, rtol=1e-5)
    for got, ref in zip(mids, mids_ref):
        assert jnp.allclose(got, ref, atol=1e-5, rtol=1e-5)
    assert jnp.allclose(X_filled, Xf_ref, atol=1e-5, rtol=1e-5)
    assert not bool(jnp.any(jnp.isnan(X_filled)))

    print("KERNEL_OK")
</pallas_src>

<mosaic_0001>
module attributes {stable_mosaic.version = 11 : i64} {
  func.func @_teacher_edge_kernel(%arg0: memref<8x8xf32, #tpu.memory_space<vmem>>, %arg1: memref<8x8xf32, #tpu.memory_space<vmem>>, %arg2: memref<8x16xf32, #tpu.memory_space<vmem>>, %arg3: memref<232x32xf32, #tpu.memory_space<vmem>>, %arg4: memref<8x96xf32, #tpu.memory_space<vmem>>, %arg5: memref<8x16xf32, #tpu.memory_space<vmem>>) attributes {dimension_semantics = [], scalar_prefetch = 0 : i64, scratch_operands = 0 : i64, tpu.core_type = #tpu.core_type<tc>} {
    %c0 = arith.constant 0 : index
    %c0_0 = arith.constant 0 : index
    %0 = vector.load %arg0[%c0, %c0_0] : memref<8x8xf32, #tpu.memory_space<vmem>>, vector<8x8xf32>
    %cst = arith.constant dense<0.000000e+00> : vector<8xf32>
    %1 = vector.multi_reduction <add>, %0, %cst [1] : vector<8x8xf32> to vector<8xf32>
    %2 = vector.shape_cast %1 : vector<8xf32> to vector<8x1xf32>
    %cst_1 = arith.constant 1.000000e+00 : f32
    %3 = vector.broadcast %cst_1 : f32 to vector<8x1xf32>
    %4 = arith.maximumf %2, %3 : vector<8x1xf32>
    %5 = tpu.reciprocal %4 : vector<8x1xf32> -> vector<8x1xf32>
    %6 = vector.broadcast %5 : vector<8x1xf32> to vector<8x8xf32>
    %7 = arith.mulf %0, %6 : vector<8x8xf32>
    %c0_2 = arith.constant 0 : index
    %c0_3 = arith.constant 0 : index
    %8 = vector.load %arg3[%c0_2, %c0_3] : memref<232x32xf32, #tpu.memory_space<vmem>>, vector<8x32xf32>
    %c8 = arith.constant 8 : index
    %c0_4 = arith.constant 0 : index
    %9 = vector.load %arg3[%c8, %c0_4] : memref<232x32xf32, #tpu.memory_space<vmem>>, vector<8x32xf32>
    %c0_5 = arith.constant 0 : index
    %c0_6 = arith.constant 0 : index
    %10 = vector.load %arg1[%c0_5, %c0_6] : memref<8x8xf32, #tpu.memory_space<vmem>>, vector<8x8xf32>
    %cst_7 = arith.constant dense<0.000000e+00> : vector<8x32xf32>
    %11 = tpu.matmul %10, %8, %cst_7 {dimension_numbers = #tpu.dot_dimension_numbers<[1], [0], [0], [1], [0, 0, 1, 1], [], []>} : vector<8x8xf32>, vector<8x32xf32>, vector<8x32xf32> -> vector<8x32xf32>
    %12 = arith.addf %11, %9 : vector<8x32xf32>
    %c0_8 = arith.constant 0 : index
    %c0_9 = arith.constant 0 : index
    %13 = vector.load %arg2[%c0_8, %c0_9] : memref<8x16xf32, #tpu.memory_space<vmem>>, vector<8x16xf32>
    %14 = arith.cmpf one, %13, %13 : vector<8x16xf32>
    %15 = vector.extract_strided_slice %12 {offsets = [0, 0], sizes = [8, 16], strides = [1, 1]} : vector<8x32xf32> to vector<8x16xf32>
    %16 = arith.select %14, %15, %13 : vector<8x16xi1>, vector<8x16xf32>
    %c0_10 = arith.constant 0 : index
    %c0_11 = arith.constant 0 : index
    %17 = vector.load %arg5[%c0_10, %c0_11] : memref<8x16xf32, #tpu.memory_space<vmem>>, vector<8x16xf32>
    tpu.vector_store %arg5[%c0_10, %c0_11], %16 {strides = array<i32>} : memref<8x16xf32, #tpu.memory_space<vmem>>, vector<8x16xf32>,
    %c16 = arith.constant 16 : index
    %c0_12 = arith.constant 0 : index
    %18 = vector.load %arg3[%c16, %c0_12] : memref<232x32xf32, #tpu.memory_space<vmem>>, vector<64x32xf32>
    %c80 = arith.constant 80 : index
    %c0_13 = arith.constant 0 : index
    %19 = vector.load %arg3[%c80, %c0_13] : memref<232x32xf32, #tpu.memory_space<vmem>>, vector<8x32xf32>
    %cst_14 = arith.constant dense<0.000000e+00> : vector<8x32xf32>
    %20 = tpu.matmul %7, %12, %cst_14 {dimension_numbers = #tpu.dot_dimension_numbers<[1], [0], [0], [1], [0, 0, 1, 1], [], []>} : vector<8x8xf32>, vector<8x32xf32>, vector<8x32xf32> -> vector<8x32xf32>
    %21 = tpu.concatenate %20, %12 in 1 : vector<8x32xf32>, vector<8x32xf32> -> vector<8x64xf32>
    %cst_15 = arith.constant dense<0.000000e+00> : vector<8x32xf32>
    %22 = tpu.matmul %21, %18, %cst_15 {dimension_numbers = #tpu.dot_dimension_numbers<[1], [0], [0], [1], [0, 0, 1, 1], [], []>} : vector<8x64xf32>, vector<64x32xf32>, vector<8x32xf32> -> vector<8x32xf32>
    %23 = arith.addf %22, %19 : vector<8x32xf32>
    %cst_16 = arith.constant 0.000000e+00 : f32
    %24 = vector.broadcast %cst_16 : f32 to vector<8x32xf32>
    %25 = arith.cmpf ogt, %23, %24 : vector<8x32xf32>
    %cst_17 = arith.constant 0.00999999977 : f32
    %26 = vector.broadcast %cst_17 : f32 to vector<8x32xf32>
    %27 = arith.mulf %26, %23 : vector<8x32xf32>
    %28 = arith.select %25, %23, %27 : vector<8x32xi1>, vector<8x32xf32>
    %c88 = arith.constant 88 : index
    %c0_18 = arith.constant 0 : index
    %29 = vector.load %arg3[%c88, %c0_18] : memref<232x32xf32, #tpu.memory_space<vmem>>, vector<64x32xf32>
    %c152 = arith.constant 152 : index
    %c0_19 = arith.constant 0 : index
    %30 = vector.load %arg3[%c152, %c0_19] : memref<232x32xf32, #tpu.memory_space<vmem>>, vector<8x32xf32>
    %cst_20 = arith.constant dense<0.000000e+00> : vector<8x32xf32>
    %31 = tpu.matmul %7, %28, %cst_20 {dimension_numbers = #tpu.dot_dimension_numbers<[1], [0], [0], [1], [0, 0, 1, 1], [], []>} : vector<8x8xf32>, vector<8x32xf32>, vector<8x32xf32> -> vector<8x32xf32>
    %32 = tpu.concatenate %31, %28 in 1 : vector<8x32xf32>, vector<8x32xf32> -> vector<8x64xf32>
    %cst_21 = arith.constant dense<0.000000e+00> : vector<8x32xf32>
    %33 = tpu.matmul %32, %29, %cst_21 {dimension_numbers = #tpu.dot_dimension_numbers<[1], [0], [0], [1], [0, 0, 1, 1], [], []>} : vector<8x64xf32>, vector<64x32xf32>, vector<8x32xf32> -> vector<8x32xf32>
    %34 = arith.addf %33, %30 : vector<8x32xf32>
    %cst_22 = arith.constant 0.000000e+00 : f32
    %35 = vector.broadcast %cst_22 : f32 to vector<8x32xf32>
    %36 = arith.cmpf ogt, %34, %35 : vector<8x32xf32>
    %cst_23 = arith.constant 0.00999999977 : f32
    %37 = vector.broadcast %cst_23 : f32 to vector<8x32xf32>
    %38 = arith.mulf %37, %34 : vector<8x32xf32>
    %39 = arith.select %36, %34, %38 : vector<8x32xi1>, vector<8x32xf32>
    %c160 = arith.constant 160 : index
    %c0_24 = arith.constant 0 : index
    %40 = vector.load %arg3[%c160, %c0_24] : memref<232x32xf32, #tpu.memory_space<vmem>>, vector<64x32xf32>
    %c224 = arith.constant 224 : index
    %c0_25 = arith.constant 0 : index
    %41 = vector.load %arg3[%c224, %c0_25] : memref<232x32xf32, #tpu.memory_space<vmem>>, vector<8x32xf32>
    %cst_26 = arith.constant dense<0.000000e+00> : vector<8x32xf32>
    %42 = tpu.matmul %7, %39, %cst_26 {dimension_numbers = #tpu.dot_dimension_numbers<[1], [0], [0], [1], [0, 0, 1, 1], [], []>} : vector<8x8xf32>, vector<8x32xf32>, vector<8x32xf32> -> vector<8x32xf32>
    %43 = tpu.concatenate %42, %39 in 1 : vector<8x32xf32>, vector<8x32xf32> -> vector<8x64xf32>
    %cst_27 = arith.constant dense<0.000000e+00> : vector<8x32xf32>
    %44 = tpu.matmul %43, %40, %cst_27 {dimension_numbers = #tpu.dot_dimension_numbers<[1], [0], [0], [1], [0, 0, 1, 1], [], []>} : vector<8x64xf32>, vector<64x32xf32>, vector<8x32xf32> -> vector<8x32xf32>
    %45 = arith.addf %44, %41 : vector<8x32xf32>
    %46 = tpu.concatenate %23, %34, %45 in 1 : vector<8x32xf32>, vector<8x32xf32>, vector<8x32xf32> -> vector<8x96xf32>
    %c0_28 = arith.constant 0 : index
    %c0_29 = arith.constant 0 : index
    %47 = vector.load %arg4[%c0_28, %c0_29] : memref<8x96xf32, #tpu.memory_space<vmem>>, vector<8x96xf32>
    tpu.vector_store %arg4[%c0_28, %c0_29], %46 {strides = array<i32>} : memref<8x96xf32, #tpu.memory_space<vmem>>, vector<8x96xf32>,
    return
  }
}

</mosaic_0001>

<llo_original>
// kernel: teacher_edge_forward.1
$region0: #{teacher_edge_forward.1}
  #allocation0 [shape = 'u32[]', space=smem, size = 0x4, offset = 0x4, fixed_abs, tag = 'smem constant byte address 0x4 - core index']
  #allocation1 [shape = 'u32[72,128]{1,0:T(1,128)}', space=vmem, size = 0x9000, scoped, tag = 'internal scratch']
  %s0 = inlined_call_operand.vmem [shape: f32[8,8], index: 0, kind: input, shape index: {}]
  %s1 = inlined_call_operand.vmem [shape: f32[8,8], index: 1, kind: input, shape index: {}]
  %s2 = inlined_call_operand.vmem [shape: f32[8,16], index: 2, kind: input, shape index: {}, may-alias: {2,5}]
  %s3 = inlined_call_operand.vmem [shape: f32[232,32], index: 3, kind: input, shape index: {}]
  %s4 = inlined_call_operand.vmem [shape: f32[8,96], index: 4, kind: output, shape index: {0}]
  %s5 = inlined_call_operand.vmem [shape: f32[8,16], index: 5, kind: output, shape index: {1}, may-alias: {2,5}]
  %6 = xla_tuple %s4, %s5
  %s7 = sld [smem:[#allocation0]]
  $region34: #{teacher_edge_forward.1} parent=0
    _
  %s9 = ssub.s32 1, %s7
  %s10 = scalar_select 0, %s9, %s7
  // Predicated region
  $region2: #{teacher_edge_forward.1} parent=0 // pred_check
    _
  $region3: #{teacher_edge_forward.1} parent=0 // pred_check_branch
    %12 = sbr.rel (0) target = $region5
  $region4: #{teacher_edge_forward.1} parent=0 // pred_region
    _
  $region5: #{teacher_edge_forward.1} parent=0 // pred_fallthru
    _
  // Predicated region
  $region6: #{teacher_edge_forward.1} parent=0 // pred_check
    _
  $region7: #{teacher_edge_forward.1} parent=0 // pred_check_branch
    %14 = sbr.rel (0) target = $region9
  $region8: #{teacher_edge_forward.1} parent=0 // pred_region
    _
  $region9: #{teacher_edge_forward.1} parent=0 // pred_fallthru
    _
  // Predicated region
  $region10: #{teacher_edge_forward.1} parent=0 // pred_check
    _
  $region11: #{teacher_edge_forward.1} parent=0 // pred_check_branch
    %16 = sbr.rel (0) target = $region13
  $region12: #{teacher_edge_forward.1} parent=0 // pred_region
    _
  $region13: #{teacher_edge_forward.1} parent=0 // pred_fallthru
    _
  // Predicated region
  $region14: #{teacher_edge_forward.1} parent=0 // pred_check
    _
  $region15: #{teacher_edge_forward.1} parent=0 // pred_check_branch
    %18 = sbr.rel (0) target = $region17
  $region16: #{teacher_edge_forward.1} parent=0 // pred_region
    _
  $region17: #{teacher_edge_forward.1} parent=0 // pred_fallthru
    _
  %v19 = vld [vmem:[%s0] sm:$0xff]
  %vm20 = vcmask 64512
  %v21 = vsel %vm20, %v19, 0.0
  %22 = vadd.xlane.f32.xlu0 %v21
  %v23 = vpop.xlane.xlu0 %22
  %v24 = vmax.f32 %v23, 1.0
  %v25 = vrcp.pop %v24
  %v26 = vmul.f32 %v24, %v25
  %v27 = vsub.f32 1.0, %v26
  %v28 = vmul.f32 %v25, %v27
  %v29 = vadd.f32 %v25, %v28
  %vm30 = vweird.f32 %v24
  %vm31 = vweird.f32 %v25
  %vm32 = vmor %vm30, %vm31
  %v33 = vsel %vm32, %v25, %v29
  %v34 = vand.u32 2147483647, %v24
  %vm35 = vcmp.eq.f32.partialorder %v34, 8.507059e+37
  %v36 = vand.u32 %v24, 2147483648
  %v37 = vor.u32 1.1754944e-38, %v36
  %v38 = vsel %vm35, %v37, %v33
  %v39 = vmul.f32 %v19, %v38
  %v40 = vld [vmem:[%s3] sm:$0xff]
  %v41 = vld [vmem:[%s3 + $0x8] sm:$0xff]
  %v42 = vld [vmem:[%s1] sm:$0xff]
  %v44 = vsel %vm20, %v42, 0
  %46 = vmatpush.msra.mxu0 0.0
  %47 = vmatpush.msra.mxu0 0.0
  %48 = vmatpush.msra.mxu0 0.0
  %49 = vmatpush.msra.mxu0 0.0
  %50 = vmatpush.msra.mxu0 0.0
  %51 = vmatpush.msra.mxu0 0.0
  %52 = vmatpush.msra.mxu0 0.0
  %53 = vmatpush.msra.mxu0 0.0
  %54 = vmatpush.msra.mxu0 0.0
  %55 = vmatpush.msra.mxu0 0.0
  %56 = vmatpush.msra.mxu0 0.0
  %57 = vmatpush.msra.mxu0 0.0
  %58 = vmatpush.msra.mxu0 0.0
  %59 = vmatpush.msra.mxu0 0.0
  %60 = vmatpush.msra.mxu0 0.0
  %61 = vmatpush.msra.mxu0 %v40
  %62 = vmatmul.f32.gmra.mxu0 %v44
  %v63 = vpop.f32.mrf.mxu0
  %v64 = vadd.f32 %v41, %v63
  %65 = vdwg.mxu0
  %v66 = vld [vmem:[%s2] sm:$0xff]
  %vm67 = vcmp.ne.f32.partialorder %v66, %v66
  %v68 = vsel %vm67, %v64, %v66
  %vm69 = vcmask 130048
  %70 = vst.msk [vmem:[%s5] sm:$0xff] %vm69, %v68
  %v71 = vld [vmem:[%s3 + $0x10] sm:$0xff]
  %v72 = vld [vmem:[%s3 + $0x18] sm:$0xff]
  %v73 = vld [vmem:[%s3 + $0x20] sm:$0xff]
  %v74 = vld [vmem:[%s3 + $0x28] sm:$0xff]
  %v75 = vld [vmem:[%s3 + $0x30] sm:$0xff]
  %v76 = vld [vmem:[%s3 + $0x38] sm:$0xff]
  %v77 = vld [vmem:[%s3 + $0x40] sm:$0xff]
  %v78 = vld [vmem:[%s3 + $0x48] sm:$0xff]
  %v79 = vld [vmem:[%s3 + $0x50] sm:$0xff]
  %v81 = vsel %vm20, %v39, 0
  %83 = vmatpush.msra.mxu0 0.0
  %84 = vmatpush.msra.mxu0 0.0
  %85 = vmatpush.msra.mxu0 0.0
  %86 = vmatpush.msra.mxu0 0.0
  %87 = vmatpush.msra.mxu0 0.0
  %88 = vmatpush.msra.mxu0 0.0
  %89 = vmatpush.msra.mxu0 0.0
  %90 = vmatpush.msra.mxu0 0.0
  %91 = vmatpush.msra.mxu0 0.0
  %92 = vmatpush.msra.mxu0 0.0
  %93 = vmatpush.msra.mxu0 0.0
  %94 = vmatpush.msra.mxu0 0.0
  %95 = vmatpush.msra.mxu0 0.0
  %96 = vmatpush.msra.mxu0 0.0
  %97 = vmatpush.msra.mxu0 0.0
  %98 = vmatpush.msra.mxu0 %v64
  %99 = vmatmul.f32.gmra.mxu0 %v81
  %v100 = vpop.f32.mrf.mxu0
  %v101 = vadd.f32 0.0, %v100
  %102 = vdwg.mxu0
  %104 = vrot.lane.b32.xlu0 %v64, 32
  %v105 = vpop.permute.xlu0 %104
  %vm107 = vcmask 261120
  %v108 = vsel %vm107, %v101, %v105
  %vm109 = vcmask 523264
  %v111 = vsel %vm109, %v108, 0
  %113 = vmatpush.msra.mxu0 0.0
  %114 = vmatpush.msra.mxu0 0.0
  %115 = vmatpush.msra.mxu0 0.0
  %116 = vmatpush.msra.mxu0 0.0
  %117 = vmatpush.msra.mxu0 0.0
  %118 = vmatpush.msra.mxu0 0.0
  %119 = vmatpush.msra.mxu0 0.0
  %120 = vmatpush.msra.mxu0 0.0
  %121 = vmatpush.msra.mxu0 %v78
  %122 = vmatpush.msra.mxu0 %v77
  %123 = vmatpush.msra.mxu0 %v76
  %124 = vmatpush.msra.mxu0 %v75
  %125 = vmatpush.msra.mxu0 %v74
  %126 = vmatpush.msra.mxu0 %v73
  %127 = vmatpush.msra.mxu0 %v72
  %128 = vmatpush.msra.mxu0 %v71
  %129 = vmatmul.f32.gmra.mxu0 %v111
  %v130 = vpop.f32.mrf.mxu0
  %v131 = vadd.f32 %v79, %v130
  %132 = vdwg.mxu0
  %vm133 = vcmp.gt.f32.partialorder %v131, 0.0
  %v134 = vmul.f32 %v131, 0.01
  %v135 = vsel %vm133, %v131, %v134
  %v136 = vld [vmem:[%s3 + $0x58] sm:$0xff]
  %v137 = vld [vmem:[%s3 + $0x60] sm:$0xff]
  %v138 = vld [vmem:[%s3 + $0x68] sm:$0xff]
  %v139 = vld [vmem:[%s3 + $0x70] sm:$0xff]
  %v140 = vld [vmem:[%s3 + $0x78] sm:$0xff]
  %v141 = vld [vmem:[%s3 + $0x80] sm:$0xff]
  %v142 = vld [vmem:[%s3 + $0x88] sm:$0xff]
  %v143 = vld [vmem:[%s3 + $0x90] sm:$0xff]
  %v144 = vld [vmem:[%s3 + $0x98] sm:$0xff]
  %145 = vmatpush.msra.mxu0 0.0
  %146 = vmatpush.msra.mxu0 0.0
  %147 = vmatpush.msra.mxu0 0.0
  %148 = vmatpush.msra.mxu0 0.0
  %149 = vmatpush.msra.mxu0 0.0
  %150 = vmatpush.msra.mxu0 0.0
  %151 = vmatpush.msra.mxu0 0.0
  %152 = vmatpush.msra.mxu0 0.0
  %153 = vmatpush.msra.mxu0 0.0
  %154 = vmatpush.msra.mxu0 0.0
  %155 = vmatpush.msra.mxu0 0.0
  %156 = vmatpush.msra.mxu0 0.0
  %157 = vmatpush.msra.mxu0 0.0
  %158 = vmatpush.msra.mxu0 0.0
  %159 = vmatpush.msra.mxu0 0.0
  %160 = vmatpush.msra.mxu0 %v135
  %161 = vmatmul.f32.gmra.mxu0 %v81
  %v162 = vpop.f32.mrf.mxu0
  %v163 = vadd.f32 0.0, %v162
  %164 = vdwg.mxu0
  %166 = vrot.lane.b32.xlu0 %v135, 32
  %v167 = vpop.permute.xlu0 %166
  %v169 = vsel %vm107, %v163, %v167
  %v171 = vsel %vm109, %v169, 0
  %173 = vmatpush.msra.mxu0 0.0
  %174 = vmatpush.msra.mxu0 0.0
  %175 = vmatpush.msra.mxu0 0.0
  %176 = vmatpush.msra.mxu0 0.0
  %177 = vmatpush.msra.mxu0 0.0
  %178 = vmatpush.msra.mxu0 0.0
  %179 = vmatpush.msra.mxu0 0.0
  %180 = vmatpush.msra.mxu0 0.0
  %181 = vmatpush.msra.mxu0 %v143
  %182 = vmatpush.msra.mxu0 %v142
  %183 = vmatpush.msra.mxu0 %v141
  %184 = vmatpush.msra.mxu0 %v140
  %185 = vmatpush.msra.mxu0 %v139
  %186 = vmatpush.msra.mxu0 %v138
  %187 = vmatpush.msra.mxu0 %v137
  %188 = vmatpush.msra.mxu0 %v136
  %189 = vmatmul.f32.gmra.mxu0 %v171
  %v190 = vpop.f32.mrf.mxu0
  %v191 = vadd.f32 %v144, %v190
  %192 = vdwg.mxu0
  %vm193 = vcmp.gt.f32.partialorder %v191, 0.0
  %v194 = vmul.f32 %v191, 0.01
  %v195 = vsel %vm193, %v191, %v194
  %v196 = vld [vmem:[%s3 + $0xa0] sm:$0xff]
  %v197 = vld [vmem:[%s3 + $0xa8] sm:$0xff]
  %v198 = vld [vmem:[%s3 + $0xb0] sm:$0xff]
  %v199 = vld [vmem:[%s3 + $0xb8] sm:$0xff]
  %v200 = vld [vmem:[%s3 + $0xc0] sm:$0xff]
  %v201 = vld [vmem:[%s3 + $0xc8] sm:$0xff]
  %v202 = vld [vmem:[%s3 + $0xd0] sm:$0xff]
  %v203 = vld [vmem:[%s3 + $0xd8] sm:$0xff]
  %v204 = vld [vmem:[%s3 + $0xe0] sm:$0xff]
  %205 = vmatpush.msra.mxu0 0.0
  %206 = vmatpush.msra.mxu0 0.0
  %207 = vmatpush.msra.mxu0 0.0
  %208 = vmatpush.msra.mxu0 0.0
  %209 = vmatpush.msra.mxu0 0.0
  %210 = vmatpush.msra.mxu0 0.0
  %211 = vmatpush.msra.mxu0 0.0
  %212 = vmatpush.msra.mxu0 0.0
  %213 = vmatpush.msra.mxu0 0.0
  %214 = vmatpush.msra.mxu0 0.0
  %215 = vmatpush.msra.mxu0 0.0
  %216 = vmatpush.msra.mxu0 0.0
  %217 = vmatpush.msra.mxu0 0.0
  %218 = vmatpush.msra.mxu0 0.0
  %219 = vmatpush.msra.mxu0 0.0
  %220 = vmatpush.msra.mxu0 %v195
  %221 = vmatmul.f32.gmra.mxu0 %v81
  %v222 = vpop.f32.mrf.mxu0
  %v223 = vadd.f32 0.0, %v222
  %224 = vdwg.mxu0
  %226 = vrot.lane.b32.xlu0 %v195, 32
  %v227 = vpop.permute.xlu0 %226
  %v229 = vsel %vm107, %v223, %v227
  %v231 = vsel %vm109, %v229, 0
  %233 = vmatpush.msra.mxu0 0.0
  %234 = vmatpush.msra.mxu0 0.0
  %235 = vmatpush.msra.mxu0 0.0
  %236 = vmatpush.msra.mxu0 0.0
  %237 = vmatpush.msra.mxu0 0.0
  %238 = vmatpush.msra.mxu0 0.0
  %239 = vmatpush.msra.mxu0 0.0
  %240 = vmatpush.msra.mxu0 0.0
  %241 = vmatpush.msra.mxu0 %v203
  %242 = vmatpush.msra.mxu0 %v202
  %243 = vmatpush.msra.mxu0 %v201
  %244 = vmatpush.msra.mxu0 %v200
  %245 = vmatpush.msra.mxu0 %v199
  %246 = vmatpush.msra.mxu0 %v198
  %247 = vmatpush.msra.mxu0 %v197
  %248 = vmatpush.msra.mxu0 %v196
  %249 = vmatmul.f32.gmra.mxu0 %v231
  %v250 = vpop.f32.mrf.mxu0
  %v251 = vadd.f32 %v204, %v250
  %252 = vdwg.mxu0
  %254 = vrot.lane.b32.xlu0 %v191, 32
  %v255 = vpop.permute.xlu0 %254
  %258 = vrot.lane.b32.xlu0 %v251, 64
  %v259 = vpop.permute.xlu0 %258
  %v261 = vsel %vm107, %v131, %v255
  %v262 = vsel %vm109, %v261, %v259
  %vm263 = vcmask 785408
  %264 = vst.msk [vmem:[%s4] sm:$0xff] %vm263, %v262
  // Predicated region
  $region18: #{teacher_edge_forward.1} parent=0 // pred_check
    _
  $region19: #{teacher_edge_forward.1} parent=0 // pred_check_branch
    %266 = sbr.rel (0) target = $region21
  $region20: #{teacher_edge_forward.1} parent=0 // pred_region
    _
  $region21: #{teacher_edge_forward.1} parent=0 // pred_fallthru
    _
  // Predicated region
  $region22: #{teacher_edge_forward.1} parent=0 // pred_check
    _
  $region23: #{teacher_edge_forward.1} parent=0 // pred_check_branch
    %268 = sbr.rel (0) target = $region25
  $region24: #{teacher_edge_forward.1} parent=0 // pred_region
    _
  $region25: #{teacher_edge_forward.1} parent=0 // pred_fallthru
    _
  // Predicated region
  $region26: #{teacher_edge_forward.1} parent=0 // pred_check
    _
  $region27: #{teacher_edge_forward.1} parent=0 // pred_check_branch
    %270 = sbr.rel (0) target = $region29
  $region28: #{teacher_edge_forward.1} parent=0 // pred_region
    _
  $region29: #{teacher_edge_forward.1} parent=0 // pred_fallthru
    _
  // Predicated region
  $region30: #{teacher_edge_forward.1} parent=0 // pred_check
    _
  $region31: #{teacher_edge_forward.1} parent=0 // pred_check_branch
    %272 = sbr.rel (0) target = $region33
  $region32: #{teacher_edge_forward.1} parent=0 // pred_region
    _
  $region33: #{teacher_edge_forward.1} parent=0 // pred_fallthru
    _

</llo_original>
